<compile_context>
chip_gen: v5e
topology: v5e:2x2
jax: 0.10.0
libtpu: 0.0.40
codegen_flags: <defaults>
</compile_context>

<pallas_src>
from functools import partial

import jax
import jax.numpy as jnp
from jax import lax
from jax.experimental import pallas as pl
from jax.experimental.pallas import tpu as pltpu


# ---------------------------------------------------------------------------
# Fused Pallas kernel: QKV projection + per-head attention + output projection
# ---------------------------------------------------------------------------

def _fused_attention_kernel(x_ref, wqkv_ref, wo_ref, o_ref, *, heads, dim_head):
    # x_ref:    (Bb, N, D)      Bb batch elements per grid step
    # wqkv_ref: (D, 3*H*Dh)     pre-transposed, q|k|v fused, scale folded in Wq
    # wo_ref:   (H*Dh, D)       pre-transposed output projection
    # o_ref:    (Bb, N, D)
    bb, n, d = x_ref.shape
    hd = heads * dim_head

    # bf16 MXU operands, f32 accumulation; softmax math stays f32.
    x2 = x_ref[...].reshape(bb * n, d).astype(jnp.bfloat16)
    wqkv = wqkv_ref[...].astype(jnp.bfloat16)
    wo = wo_ref[...].astype(jnp.bfloat16)

    # Single fused QKV projection over the whole batch block:
    #   (Bb*N, D) @ (D, 3*H*Dh) -> (Bb*N, 3*H*Dh), f32 accumulation.
    qkv = jnp.dot(x2, wqkv, preferred_element_type=jnp.float32)
    qkv = qkv.reshape(bb, n, 3 * hd)
    q = qkv[:, :, 0:hd]            # softmax scale already folded into Wq
    k = qkv[:, :, hd:2 * hd]
    v = qkv[:, :, 2 * hd:3 * hd]

    # Per-head attention, statically unrolled over H (small), batched over Bb
    # with 3-D einsums (known-good Mosaic lowering). Per-head outputs are
    # collected into one slab so the output projection is a single matmul.
    # NOTE: the Dh=16 lane slices are not 128-aligned (relayout copies); at
    # these sizes that's hidden slack — pad head columns to 128 lanes if it
    # ever shows up as binding in the bundle dump.
    head_outs = []
    for h in range(heads):
        sl = slice(h * dim_head, (h + 1) * dim_head)
        qh = q[:, :, sl].astype(jnp.bfloat16)           # (Bb, N, Dh)
        kh = k[:, :, sl].astype(jnp.bfloat16)
        vh = v[:, :, sl].astype(jnp.bfloat16)

        # QK^T without materializing k.T: contract the Dh axes directly.
        s = jnp.einsum('bqd,bkd->bqk', qh, kh,
                       preferred_element_type=jnp.float32)          # (Bb, N, N)
        s = s - jnp.max(s, axis=-1, keepdims=True)                  # stable
        p = jnp.exp(s)
        p = p / jnp.sum(p, axis=-1, keepdims=True)                  # exact norm
        head_outs.append(
            jnp.einsum('bqk,bkd->bqd', p.astype(jnp.bfloat16), vh,
                       preferred_element_type=jnp.float32))         # (Bb, N, Dh)

    # Merged head-concat + output projection:
    #   ONE (Bb*N, H*Dh) @ (H*Dh, D) matmul (contraction depth 64, not 16).
    oh_all = jnp.concatenate(head_outs, axis=-1).reshape(bb * n, hd)
    out = jnp.dot(oh_all.astype(jnp.bfloat16), wo,
                  preferred_element_type=jnp.float32)               # (Bb*N, D)
    o_ref[...] = out.reshape(bb, n, d).astype(o_ref.dtype)

    # TODO(synk): optional branches (context/cross-attn, masks, rel_pos /
    # DynamicPositionTimeBias bias, mem / KV cache, qk_norm, value/head gates,
    # rotary, dropout, on_attn GLU) are not exercised by the default config
    # and are not implemented here.


# ---------------------------------------------------------------------------
# Parameters (weights pre-transposed / pre-fused / pre-scaled once at init)
# ---------------------------------------------------------------------------

class AttentionParams:
    def __init__(self, key, dim, heads, dim_head):
        hd = heads * dim_head
        k0, k1, k2, k3 = jax.random.split(key, 4)
        # PyTorch nn.Linear weight layout is (out_features, in_features).
        self.Wq = 0.02 * jax.random.normal(k0, (hd, dim), jnp.float32)
        self.Wk = 0.02 * jax.random.normal(k1, (hd, dim), jnp.float32)
        self.Wv = 0.02 * jax.random.normal(k2, (hd, dim), jnp.float32)
        self.Wo = 0.02 * jax.random.normal(k3, (dim, hd), jnp.float32)
        self.heads = heads
        self.dim_head = dim_head
        self.scale = dim_head ** (-0.5)
        # Kernel layout: pre-transpose to (in, out), fuse q|k|v, and fold the
        # softmax scale into Wq -> zero runtime transposes / scale multiplies.
        self.Wqkv_t = jnp.concatenate(
            [self.Wq.T * self.scale, self.Wk.T, self.Wv.T], axis=1)  # (D, 3*H*Dh)
        self.Wo_t = self.Wo.T                                        # (H*Dh, D)


# ---------------------------------------------------------------------------
# Forward wrapper: one pallas_call for the whole module
# ---------------------------------------------------------------------------

def _pick_batch_block(B, N, target_rows=256):
    """Bb batch elements per grid step: ~target_rows MXU rows per step while
    keeping >=2 grid steps (so both v7x TensorCores get work) and Bb | B."""
    if B <= 1:
        return 1
    want = max(1, min(B // 2, target_rows // max(N, 1)))
    bb = want
    while B % bb != 0:
        bb -= 1
    return max(bb, 1)


def attention_forward(params, x):
    """x: (B, N, D) -> (B, N, D). Mirrors Attention.forward(x), default path."""
    B, N, D = x.shape
    H, Dh = params.heads, params.dim_head
    hd = H * Dh

    Bb = _pick_batch_block(B, N)
    assert B % Bb == 0

    kernel = partial(_fused_attention_kernel, heads=H, dim_head=Dh)

    return pl.pallas_call(
        kernel,
        out_shape=jax.ShapeDtypeStruct((B, N, D), x.dtype),
        grid=(B // Bb,),
        in_specs=[
            pl.BlockSpec((Bb, N, D), lambda b: (b, 0, 0)),     # x, Bb batches
            pl.BlockSpec((D, 3 * hd), lambda b: (0, 0)),       # fused Wqkv
            pl.BlockSpec((hd, D), lambda b: (0, 0)),           # Wo
        ],
        out_specs=pl.BlockSpec((Bb, N, D), lambda b: (b, 0, 0)),
        compiler_params=pltpu.CompilerParams(
            dimension_semantics=("parallel",)),                # megacore over B
    )(x, params.Wqkv_t, params.Wo_t)


# ---------------------------------------------------------------------------
# Pure-JAX f32 reference (implements the module math independently)
# ---------------------------------------------------------------------------

def attention_reference(params, x):
    B, N, D = x.shape
    H, Dh = params.heads, params.dim_head
    q = jnp.einsum('bnd,od->bno', x, params.Wq)
    k = jnp.einsum('bnd,od->bno', x, params.Wk)
    v = jnp.einsum('bnd,od->bno', x, params.Wv)

    def split_heads(t):
        return t.reshape(B, N, H, Dh).transpose(0, 2, 1, 3)    # (B, H, N, Dh)

    q, k, v = map(split_heads, (q, k, v))
    s = jnp.einsum('bhqd,bhkd->bhqk', q, k) * params.scale
    p = jax.nn.softmax(s, axis=-1)
    o = jnp.einsum('bhqk,bhkd->bhqd', p, v)
    o = o.transpose(0, 2, 1, 3).reshape(B, N, H * Dh)
    return jnp.einsum('bne,oe->bno', o, params.Wo)


# ---------------------------------------------------------------------------

if __name__ == "__main__":
    B, N, DIM = 2, 8, 32
    HEADS, DIM_HEAD = 4, 16

    key = jax.random.PRNGKey(0)
    kx, kp = jax.random.split(key)
    x = jax.random.normal(kx, (B, N, DIM), jnp.float32)
    params = AttentionParams(kp, DIM, HEADS, DIM_HEAD)

    out = attention_forward(params, x)
    out = jax.block_until_ready(out)

    assert out.shape == (B, N, DIM)
    assert jnp.all(jnp.isfinite(out))

    ref = attention_reference(params, x)
    err = float(jnp.max(jnp.abs(out - ref)))
    assert err < 2e-3, f"mismatch vs pure-JAX reference: max abs err = {err}"

    print("KERNEL_OK")
</pallas_src>

<mosaic_0001>
module attributes {stable_mosaic.version = 11 : i64} {
  func.func @_fused_attention_kernel(%arg0: i32, %arg1: memref<1x8x32xf32, #tpu.memory_space<vmem>>, %arg2: memref<32x192xf32, #tpu.memory_space<vmem>>, %arg3: memref<64x32xf32, #tpu.memory_space<vmem>>, %arg4: memref<1x8x32xf32, #tpu.memory_space<vmem>>) attributes {dimension_semantics = [#tpu.dimension_semantics<parallel>], iteration_bounds = array<i64: 2>, scalar_prefetch = 0 : i64, scratch_operands = 0 : i64, tpu.core_type = #tpu.core_type<tc>, window_params = [{transform_indices = @transform_0, window_bounds = array<i64: 1, 8, 32>}, {pipeline_mode = #tpu.pipeline_mode<synchronous>, transform_indices = @transform_1, window_bounds = array<i64: 32, 192>}, {pipeline_mode = #tpu.pipeline_mode<synchronous>, transform_indices = @transform_2, window_bounds = array<i64: 64, 32>}, {transform_indices = @transform_3, window_bounds = array<i64: 1, 8, 32>}]} {
    %c0 = arith.constant 0 : index
    %c0_0 = arith.constant 0 : index
    %c0_1 = arith.constant 0 : index
    %0 = vector.load %arg1[%c0, %c0_0, %c0_1] : memref<1x8x32xf32, #tpu.memory_space<vmem>>, vector<1x8x32xf32>
    %1 = vector.shape_cast %0 : vector<1x8x32xf32> to vector<8x32xf32>
    %2 = arith.truncf %1 : vector<8x32xf32> to vector<8x32xbf16>
    %c0_2 = arith.constant 0 : index
    %c0_3 = arith.constant 0 : index
    %3 = vector.load %arg2[%c0_2, %c0_3] : memref<32x192xf32, #tpu.memory_space<vmem>>, vector<32x192xf32>
    %4 = arith.truncf %3 : vector<32x192xf32> to vector<32x192xbf16>
    %c0_4 = arith.constant 0 : index
    %c0_5 = arith.constant 0 : index
    %5 = vector.load %arg3[%c0_4, %c0_5] : memref<64x32xf32, #tpu.memory_space<vmem>>, vector<64x32xf32>
    %6 = arith.truncf %5 : vector<64x32xf32> to vector<64x32xbf16>
    %cst = arith.constant dense<0.000000e+00> : vector<8x192xf32>
    %7 = tpu.matmul %2, %4, %cst {dimension_numbers = #tpu.dot_dimension_numbers<[1], [0], [0], [1], [0, 0, 1, 1], [], []>} : vector<8x32xbf16>, vector<32x192xbf16>, vector<8x192xf32> -> vector<8x192xf32>
    %8 = vector.shape_cast %7 : vector<8x192xf32> to vector<1x8x192xf32>
    %9 = vector.extract_strided_slice %8 {offsets = [0, 0, 0], sizes = [1, 8, 64], strides = [1, 1, 1]} : vector<1x8x192xf32> to vector<1x8x64xf32>
    %10 = vector.extract_strided_slice %8 {offsets = [0, 0, 64], sizes = [1, 8, 64], strides = [1, 1, 1]} : vector<1x8x192xf32> to vector<1x8x64xf32>
    %11 = vector.extract_strided_slice %8 {offsets = [0, 0, 128], sizes = [1, 8, 64], strides = [1, 1, 1]} : vector<1x8x192xf32> to vector<1x8x64xf32>
    %12 = vector.extract_strided_slice %9 {offsets = [0, 0, 0], sizes = [1, 8, 16], strides = [1, 1, 1]} : vector<1x8x64xf32> to vector<1x8x16xf32>
    %13 = arith.truncf %12 : vector<1x8x16xf32> to vector<1x8x16xbf16>
    %14 = vector.extract_strided_slice %10 {offsets = [0, 0, 0], sizes = [1, 8, 16], strides = [1, 1, 1]} : vector<1x8x64xf32> to vector<1x8x16xf32>
    %15 = arith.truncf %14 : vector<1x8x16xf32> to vector<1x8x16xbf16>
    %16 = vector.extract_strided_slice %11 {offsets = [0, 0, 0], sizes = [1, 8, 16], strides = [1, 1, 1]} : vector<1x8x64xf32> to vector<1x8x16xf32>
    %17 = arith.truncf %16 : vector<1x8x16xf32> to vector<1x8x16xbf16>
    "tpu.trace_start"() <{level = 10 : i32, message = "bqd,bkd->bqk"}> : () -> ()
    %cst_6 = arith.constant dense<0.000000e+00> : vector<1x8x8xf32>
    %18 = tpu.matmul %13, %15, %cst_6 {dimension_numbers = #tpu.dot_dimension_numbers<[2], [2], [1], [1], [0, 0, 0, 1, 1, 1], [0], [0]>} : vector<1x8x16xbf16>, vector<1x8x16xbf16>, vector<1x8x8xf32> -> vector<1x8x8xf32>
    "tpu.trace_stop"() : () -> ()
    %cst_7 = arith.constant dense<0xFF800000> : vector<1x8xf32>
    %19 = vector.multi_reduction <maximumf>, %18, %cst_7 [2] : vector<1x8x8xf32> to vector<1x8xf32>
    %20 = vector.shape_cast %19 : vector<1x8xf32> to vector<1x8x1xf32>
    %21 = vector.broadcast %20 : vector<1x8x1xf32> to vector<1x8x8xf32>
    %22 = arith.subf %18, %21 : vector<1x8x8xf32>
    %23 = math.exp %22 : vector<1x8x8xf32>
    %cst_8 = arith.constant dense<0.000000e+00> : vector<1x8xf32>
    %24 = vector.multi_reduction <add>, %23, %cst_8 [2] : vector<1x8x8xf32> to vector<1x8xf32>
    %25 = vector.shape_cast %24 : vector<1x8xf32> to vector<1x8x1xf32>
    %26 = vector.broadcast %25 : vector<1x8x1xf32> to vector<1x8x8xf32>
    %27 = arith.divf %23, %26 : vector<1x8x8xf32>
    %28 = arith.truncf %27 : vector<1x8x8xf32> to vector<1x8x8xbf16>
    "tpu.trace_start"() <{level = 10 : i32, message = "bqk,bkd->bqd"}> : () -> ()
    %cst_9 = arith.constant dense<0.000000e+00> : vector<1x8x16xf32>
    %29 = tpu.matmul %28, %17, %cst_9 {dimension_numbers = #tpu.dot_dimension_numbers<[2], [1], [1], [2], [0, 0, 0, 1, 1, 2], [0], [0]>} : vector<1x8x8xbf16>, vector<1x8x16xbf16>, vector<1x8x16xf32> -> vector<1x8x16xf32>
    "tpu.trace_stop"() : () -> ()
    %30 = vector.extract_strided_slice %9 {offsets = [0, 0, 16], sizes = [1, 8, 16], strides = [1, 1, 1]} : vector<1x8x64xf32> to vector<1x8x16xf32>
    %31 = arith.truncf %30 : vector<1x8x16xf32> to vector<1x8x16xbf16>
    %32 = vector.extract_strided_slice %10 {offsets = [0, 0, 16], sizes = [1, 8, 16], strides = [1, 1, 1]} : vector<1x8x64xf32> to vector<1x8x16xf32>
    %33 = arith.truncf %32 : vector<1x8x16xf32> to vector<1x8x16xbf16>
    %34 = vector.extract_strided_slice %11 {offsets = [0, 0, 16], sizes = [1, 8, 16], strides = [1, 1, 1]} : vector<1x8x64xf32> to vector<1x8x16xf32>
    %35 = arith.truncf %34 : vector<1x8x16xf32> to vector<1x8x16xbf16>
    "tpu.trace_start"() <{level = 10 : i32, message = "bqd,bkd->bqk"}> : () -> ()
    %cst_10 = arith.constant dense<0.000000e+00> : vector<1x8x8xf32>
    %36 = tpu.matmul %31, %33, %cst_10 {dimension_numbers = #tpu.dot_dimension_numbers<[2], [2], [1], [1], [0, 0, 0, 1, 1, 1], [0], [0]>} : vector<1x8x16xbf16>, vector<1x8x16xbf16>, vector<1x8x8xf32> -> vector<1x8x8xf32>
    "tpu.trace_stop"() : () -> ()
    %cst_11 = arith.constant dense<0xFF800000> : vector<1x8xf32>
    %37 = vector.multi_reduction <maximumf>, %36, %cst_11 [2] : vector<1x8x8xf32> to vector<1x8xf32>
    %38 = vector.shape_cast %37 : vector<1x8xf32> to vector<1x8x1xf32>
    %39 = vector.broadcast %38 : vector<1x8x1xf32> to vector<1x8x8xf32>
    %40 = arith.subf %36, %39 : vector<1x8x8xf32>
    %41 = math.exp %40 : vector<1x8x8xf32>
    %cst_12 = arith.constant dense<0.000000e+00> : vector<1x8xf32>
    %42 = vector.multi_reduction <add>, %41, %cst_12 [2] : vector<1x8x8xf32> to vector<1x8xf32>
    %43 = vector.shape_cast %42 : vector<1x8xf32> to vector<1x8x1xf32>
    %44 = vector.broadcast %43 : vector<1x8x1xf32> to vector<1x8x8xf32>
    %45 = arith.divf %41, %44 : vector<1x8x8xf32>
    %46 = arith.truncf %45 : vector<1x8x8xf32> to vector<1x8x8xbf16>
    "tpu.trace_start"() <{level = 10 : i32, message = "bqk,bkd->bqd"}> : () -> ()
    %cst_13 = arith.constant dense<0.000000e+00> : vector<1x8x16xf32>
    %47 = tpu.matmul %46, %35, %cst_13 {dimension_numbers = #tpu.dot_dimension_numbers<[2], [1], [1], [2], [0, 0, 0, 1, 1, 2], [0], [0]>} : vector<1x8x8xbf16>, vector<1x8x16xbf16>, vector<1x8x16xf32> -> vector<1x8x16xf32>
    "tpu.trace_stop"() : () -> ()
    %48 = vector.extract_strided_slice %9 {offsets = [0, 0, 32], sizes = [1, 8, 16], strides = [1, 1, 1]} : vector<1x8x64xf32> to vector<1x8x16xf32>
    %49 = arith.truncf %48 : vector<1x8x16xf32> to vector<1x8x16xbf16>
    %50 = vector.extract_strided_slice %10 {offsets = [0, 0, 32], sizes = [1, 8, 16], strides = [1, 1, 1]} : vector<1x8x64xf32> to vector<1x8x16xf32>
    %51 = arith.truncf %50 : vector<1x8x16xf32> to vector<1x8x16xbf16>
    %52 = vector.extract_strided_slice %11 {offsets = [0, 0, 32], sizes = [1, 8, 16], strides = [1, 1, 1]} : vector<1x8x64xf32> to vector<1x8x16xf32>
    %53 = arith.truncf %52 : vector<1x8x16xf32> to vector<1x8x16xbf16>
    "tpu.trace_start"() <{level = 10 : i32, message = "bqd,bkd->bqk"}> : () -> ()
    %cst_14 = arith.constant dense<0.000000e+00> : vector<1x8x8xf32>
    %54 = tpu.matmul %49, %51, %cst_14 {dimension_numbers = #tpu.dot_dimension_numbers<[2], [2], [1], [1], [0, 0, 0, 1, 1, 1], [0], [0]>} : vector<1x8x16xbf16>, vector<1x8x16xbf16>, vector<1x8x8xf32> -> vector<1x8x8xf32>
    "tpu.trace_stop"() : () -> ()
    %cst_15 = arith.constant dense<0xFF800000> : vector<1x8xf32>
    %55 = vector.multi_reduction <maximumf>, %54, %cst_15 [2] : vector<1x8x8xf32> to vector<1x8xf32>
    %56 = vector.shape_cast %55 : vector<1x8xf32> to vector<1x8x1xf32>
    %57 = vector.broadcast %56 : vector<1x8x1xf32> to vector<1x8x8xf32>
    %58 = arith.subf %54, %57 : vector<1x8x8xf32>
    %59 = math.exp %58 : vector<1x8x8xf32>
    %cst_16 = arith.constant dense<0.000000e+00> : vector<1x8xf32>
    %60 = vector.multi_reduction <add>, %59, %cst_16 [2] : vector<1x8x8xf32> to vector<1x8xf32>
    %61 = vector.shape_cast %60 : vector<1x8xf32> to vector<1x8x1xf32>
    %62 = vector.broadcast %61 : vector<1x8x1xf32> to vector<1x8x8xf32>
    %63 = arith.divf %59, %62 : vector<1x8x8xf32>
    %64 = arith.truncf %63 : vector<1x8x8xf32> to vector<1x8x8xbf16>
    "tpu.trace_start"() <{level = 10 : i32, message = "bqk,bkd->bqd"}> : () -> ()
    %cst_17 = arith.constant dense<0.000000e+00> : vector<1x8x16xf32>
    %65 = tpu.matmul %64, %53, %cst_17 {dimension_numbers = #tpu.dot_dimension_numbers<[2], [1], [1], [2], [0, 0, 0, 1, 1, 2], [0], [0]>} : vector<1x8x8xbf16>, vector<1x8x16xbf16>, vector<1x8x16xf32> -> vector<1x8x16xf32>
    "tpu.trace_stop"() : () -> ()
    %66 = vector.extract_strided_slice %9 {offsets = [0, 0, 48], sizes = [1, 8, 16], strides = [1, 1, 1]} : vector<1x8x64xf32> to vector<1x8x16xf32>
    %67 = arith.truncf %66 : vector<1x8x16xf32> to vector<1x8x16xbf16>
    %68 = vector.extract_strided_slice %10 {offsets = [0, 0, 48], sizes = [1, 8, 16], strides = [1, 1, 1]} : vector<1x8x64xf32> to vector<1x8x16xf32>
    %69 = arith.truncf %68 : vector<1x8x16xf32> to vector<1x8x16xbf16>
    %70 = vector.extract_strided_slice %11 {offsets = [0, 0, 48], sizes = [1, 8, 16], strides = [1, 1, 1]} : vector<1x8x64xf32> to vector<1x8x16xf32>
    %71 = arith.truncf %70 : vector<1x8x16xf32> to vector<1x8x16xbf16>
    "tpu.trace_start"() <{level = 10 : i32, message = "bqd,bkd->bqk"}> : () -> ()
    %cst_18 = arith.constant dense<0.000000e+00> : vector<1x8x8xf32>
    %72 = tpu.matmul %67, %69, %cst_18 {dimension_numbers = #tpu.dot_dimension_numbers<[2], [2], [1], [1], [0, 0, 0, 1, 1, 1], [0], [0]>} : vector<1x8x16xbf16>, vector<1x8x16xbf16>, vector<1x8x8xf32> -> vector<1x8x8xf32>
    "tpu.trace_stop"() : () -> ()
    %cst_19 = arith.constant dense<0xFF800000> : vector<1x8xf32>
    %73 = vector.multi_reduction <maximumf>, %72, %cst_19 [2] : vector<1x8x8xf32> to vector<1x8xf32>
    %74 = vector.shape_cast %73 : vector<1x8xf32> to vector<1x8x1xf32>
    %75 = vector.broadcast %74 : vector<1x8x1xf32> to vector<1x8x8xf32>
    %76 = arith.subf %72, %75 : vector<1x8x8xf32>
    %77 = math.exp %76 : vector<1x8x8xf32>
    %cst_20 = arith.constant dense<0.000000e+00> : vector<1x8xf32>
    %78 = vector.multi_reduction <add>, %77, %cst_20 [2] : vector<1x8x8xf32> to vector<1x8xf32>
    %79 = vector.shape_cast %78 : vector<1x8xf32> to vector<1x8x1xf32>
    %80 = vector.broadcast %79 : vector<1x8x1xf32> to vector<1x8x8xf32>
    %81 = arith.divf %77, %80 : vector<1x8x8xf32>
    %82 = arith.truncf %81 : vector<1x8x8xf32> to vector<1x8x8xbf16>
    "tpu.trace_start"() <{level = 10 : i32, message = "bqk,bkd->bqd"}> : () -> ()
    %cst_21 = arith.constant dense<0.000000e+00> : vector<1x8x16xf32>
    %83 = tpu.matmul %82, %71, %cst_21 {dimension_numbers = #tpu.dot_dimension_numbers<[2], [1], [1], [2], [0, 0, 0, 1, 1, 2], [0], [0]>} : vector<1x8x8xbf16>, vector<1x8x16xbf16>, vector<1x8x16xf32> -> vector<1x8x16xf32>
    "tpu.trace_stop"() : () -> ()
    %84 = tpu.concatenate %29, %47, %65, %83 in 2 : vector<1x8x16xf32>, vector<1x8x16xf32>, vector<1x8x16xf32>, vector<1x8x16xf32> -> vector<1x8x64xf32>
    %85 = vector.shape_cast %84 : vector<1x8x64xf32> to vector<8x64xf32>
    %86 = arith.truncf %85 : vector<8x64xf32> to vector<8x64xbf16>
    %cst_22 = arith.constant dense<0.000000e+00> : vector<8x32xf32>
    %87 = tpu.matmul %86, %6, %cst_22 {dimension_numbers = #tpu.dot_dimension_numbers<[1], [0], [0], [1], [0, 0, 1, 1], [], []>} : vector<8x64xbf16>, vector<64x32xbf16>, vector<8x32xf32> -> vector<8x32xf32>
    %88 = vector.shape_cast %87 : vector<8x32xf32> to vector<1x8x32xf32>
    %c0_23 = arith.constant 0 : index
    %c0_24 = arith.constant 0 : index
    %c0_25 = arith.constant 0 : index
    %89 = vector.load %arg4[%c0_23, %c0_24, %c0_25] : memref<1x8x32xf32, #tpu.memory_space<vmem>>, vector<1x8x32xf32>
    tpu.vector_store %arg4[%c0_23, %c0_24, %c0_25], %88 {strides = array<i32>} : memref<1x8x32xf32, #tpu.memory_space<vmem>>, vector<1x8x32xf32>,
    return
  }
  func.func @transform_0(%arg0: i32) -> (i32, i32, i32) {
    %c0_i32 = arith.constant 0 : i32
    %c0_i32_0 = arith.constant 0 : i32
    %c0_i32_1 = arith.constant 0 : i32
    return %arg0, %c0_i32, %c0_i32_0 : i32, i32, i32
  }
  func.func @transform_1(%arg0: i32) -> (i32, i32) {
    %c0_i32 = arith.constant 0 : i32
    %c0_i32_0 = arith.constant 0 : i32
    %c0_i32_1 = arith.constant 0 : i32
    return %c0_i32, %c0_i32_0 : i32, i32
  }
  func.func @transform_2(%arg0: i32) -> (i32, i32) {
    %c0_i32 = arith.constant 0 : i32
    %c0_i32_0 = arith.constant 0 : i32
    %c0_i32_1 = arith.constant 0 : i32
    return %c0_i32, %c0_i32_0 : i32, i32
  }
  func.func @transform_3(%arg0: i32) -> (i32, i32, i32) {
    %c0_i32 = arith.constant 0 : i32
    %c0_i32_0 = arith.constant 0 : i32
    %c0_i32_1 = arith.constant 0 : i32
    return %arg0, %c0_i32, %c0_i32_0 : i32, i32, i32
  }
}

</mosaic_0001>

<llo_original>
// kernel: tpu_custom_call.1
$region0: #{tpu_custom_call.1}
  #allocation0 [shape = 'u32[]', space=smem, size = 0x4, offset = 0x4, fixed_abs, tag = 'smem constant byte address 0x4 - core index']
  #allocation1 [shape = 'u32[72,128]{1,0:T(1,128)}', space=vmem, size = 0x9000, scoped, tag = 'internal scratch']
  %s0 = inlined_call_operand.vmem [shape: f32[2,8,32], index: 0, kind: input, shape index: {}]
  %s1 = inlined_call_operand.vmem [shape: f32[32,192], index: 1, kind: input, shape index: {}]
  %s2 = inlined_call_operand.vmem [shape: f32[64,32], index: 2, kind: input, shape index: {}]
  %s3 = inlined_call_operand.hbm [shape: f32[2,8,32], index: 3, kind: output, shape index: {}]
  %s4 = sld [smem:[#allocation0]]
  $region45: #{tpu_custom_call.1} parent=0
    _
  %s6 = ssub.s32 1, %s4
  %s7 = scalar_select 0, %s6, %s4
  $region1: #{tpu_custom_call.1} parent=0
    #allocation2 [shape = 'u8[8192]{0}', space=vmem, size = 0x2000, scoped, tag = 'output window, operand 0']
    #allocation3 [shape = 's32[2]{0}', space=sflag, size = 0x8, scoped, tag = 'scoped memory for tpu_custom_call.1']
    %8 = vsyncpa [#allocation3], 0
    %s9 = scalar_lea.sflag [#allocation3], 1
    %10 = vsyncpa %s9, 0
    loop: start=0, step=1, limit=4
    $region2: #{tpu_custom_call.1} parent=1 // loop_pre_header
      _
    $region3: #{tpu_custom_call.1} parent=1 // loop_header
      %s12 = sphi 0, %s16
      %p13 = scmp.ge.s32.totalorder %s12, 4
      %s22 = sphi 0, %s24
      %s25 = sphi 0, %s22
      %s26 = sphi 0, %s25
      %s42 = sphi 0, %s26
      %s46 = sphi 0, %s46
      %s48 = sphi 0, %s46
      %s49 = sphi 0, %s48
      %s63 = sphi 0, %s49
      %s67 = sphi 0, %s67
      %s69 = sphi 0, %s67
      %s70 = sphi 0, %s69
      %s84 = sphi 0, %s70
      %s90 = sphi 0, %s92
      %s93 = sphi 0, %s90
      %s94 = sphi 0, %s93
      %s110 = sphi 0, %s94
    $region4: #{tpu_custom_call.1} parent=1 // loop_header_branch
      %15 = sbr.rel (%p13) target = $region8
    $region5: #{tpu_custom_call.1} parent=1 // loop_body
      %s17 = ssub.s32 %s12, 1
      %s18 = ssub.s32 %s12, 2
      %s19 = sadd.s32 %s12, 1
      %s20 = ssub.s32 %s12, %s19
      %p21 = scmp.eq.s32.totalorder %s20, 0
      %s23 = sadd.s32 %s22, 1
      %s24 = scalar_select %p21, %s22, %s23
      %p27 = pneg %p21
      %p28 = scmp.eq.s32.totalorder %s12, 1
      %p29 = por %p27, %p28
      %p30 = scmp.ne.s32.totalorder %s22, %s25
      %p31 = scmp.eq.s32.totalorder %s12, 0
      %p32 = por %p30, %p31
      %p33 = scmp.ne.s32.totalorder %s22, %s25
      %p34 = scmp.eq.s32.totalorder %s17, 1
      %p35 = por %p33, %p34
      %p36 = scmp.ne.s32.totalorder %s25, %s26
      %p37 = scmp.eq.s32.totalorder %s17, 0
      %p38 = por %p36, %p37
      %p39 = scmp.ne.s32.totalorder %s25, %s26
      %p40 = scmp.eq.s32.totalorder %s18, 1
      %p41 = por %p39, %p40
      %p43 = scmp.ne.s32.totalorder %s26, %s42
      %p44 = scmp.eq.s32.totalorder %s18, 0
      %p45 = por %p43, %p44
      %s47 = sadd.s32 %s46, 1
      %p50 = scmp.eq.s32.totalorder %s12, 1
      %p51 = scmp.ne.s32.totalorder %s46, %s48
      %p52 = scmp.eq.s32.totalorder %s12, 0
      %p53 = por %p51, %p52
      %p54 = scmp.ne.s32.totalorder %s46, %s48
      %p55 = scmp.eq.s32.totalorder %s17, 1
      %p56 = por %p54, %p55
      %p57 = scmp.ne.s32.totalorder %s48, %s49
      %p58 = scmp.eq.s32.totalorder %s17, 0
      %p59 = por %p57, %p58
      %p60 = scmp.ne.s32.totalorder %s48, %s49
      %p61 = scmp.eq.s32.totalorder %s18, 1
      %p62 = por %p60, %p61
      %p64 = scmp.ne.s32.totalorder %s49, %s63
      %p65 = scmp.eq.s32.totalorder %s18, 0
      %p66 = por %p64, %p65
      %s68 = sadd.s32 %s67, 1
      %p71 = scmp.eq.s32.totalorder %s12, 1
      %p72 = scmp.ne.s32.totalorder %s67, %s69
      %p73 = scmp.eq.s32.totalorder %s12, 0
      %p74 = por %p72, %p73
      %p75 = scmp.ne.s32.totalorder %s67, %s69
      %p76 = scmp.eq.s32.totalorder %s17, 1
      %p77 = por %p75, %p76
      %p78 = scmp.ne.s32.totalorder %s69, %s70
      %p79 = scmp.eq.s32.totalorder %s17, 0
      %p80 = por %p78, %p79
      %p81 = scmp.ne.s32.totalorder %s69, %s70
      %p82 = scmp.eq.s32.totalorder %s18, 1
      %p83 = por %p81, %p82
      %p85 = scmp.ne.s32.totalorder %s70, %s84
      %p86 = scmp.eq.s32.totalorder %s18, 0
      %p87 = por %p85, %p86
      %s88 = ssub.s32 %s12, %s19
      %p89 = scmp.eq.s32.totalorder %s88, 0
      %s91 = sadd.s32 %s90, 1
      %s92 = scalar_select %p89, %s90, %s91
      %p95 = pneg %p89
      %p96 = scmp.eq.s32.totalorder %s12, 1
      %p97 = por %p95, %p96
      %p98 = scmp.ne.s32.totalorder %s90, %s93
      %p99 = scmp.eq.s32.totalorder %s12, 0
      %p100 = por %p98, %p99
      %p101 = scmp.ne.s32.totalorder %s90, %s93
      %p102 = scmp.eq.s32.totalorder %s17, 1
      %p103 = por %p101, %p102
      %p104 = scmp.ne.s32.totalorder %s93, %s94
      %p105 = scmp.eq.s32.totalorder %s17, 0
      %p106 = por %p104, %p105
      %p107 = scmp.ne.s32.totalorder %s93, %s94
      %p108 = scmp.eq.s32.totalorder %s18, 1
      %p109 = por %p107, %p108
      %p111 = scmp.ne.s32.totalorder %s94, %s110
      %p112 = scmp.eq.s32.totalorder %s18, 0
      %p113 = por %p111, %p112
      %p114 = scmp.le.s32.totalorder 1, %s12
      %p115 = scmp.lt.s32.totalorder %s12, 3
      %p116 = pnand %p114, %p115
      %p117 = pneg %p116
      // Predicated region
      $region9: #{tpu_custom_call.1} parent=5 // pred_check
        _
      $region10: #{tpu_custom_call.1} parent=5 // pred_check_branch
        %119 = sbr.rel (%p116) target = $region12
      $region11: #{tpu_custom_call.1} parent=5 // pred_region
        %s120 = ssub.s32 %s12, 1
        // Predicated region
        $region13: #{tpu_custom_call.1} parent=11 // pred_check
          %p121 = pneg %p59
        $region14: #{tpu_custom_call.1} parent=11 // pred_check_branch
          %123 = sbr.rel (%p121) target = $region16
        $region15: #{tpu_custom_call.1} parent=11 // pred_region
          _
        $region16: #{tpu_custom_call.1} parent=11 // pred_fallthru
          _
        // Predicated region
        $region17: #{tpu_custom_call.1} parent=11 // pred_check
          %p124 = pneg %p80
        $region18: #{tpu_custom_call.1} parent=11 // pred_check_branch
          %126 = sbr.rel (%p124) target = $region20
        $region19: #{tpu_custom_call.1} parent=11 // pred_region
          _
        $region20: #{tpu_custom_call.1} parent=11 // pred_fallthru
          _
      $region12: #{tpu_custom_call.1} parent=5 // pred_fallthru
        _
      %p127 = scmp.lt.s32.totalorder %s12, 2
      // Predicated region
      $region21: #{tpu_custom_call.1} parent=5 // pred_check
        %p128 = pneg %p127
      $region22: #{tpu_custom_call.1} parent=5 // pred_check_branch
        %130 = sbr.rel (%p128) target = $region24
      $region23: #{tpu_custom_call.1} parent=5 // pred_region
        // Predicated region
        $region25: #{tpu_custom_call.1} parent=23 // pred_check
          %p131 = pneg %p32
        $region26: #{tpu_custom_call.1} parent=23 // pred_check_branch
          %133 = sbr.rel (%p131) target = $region28
        $region27: #{tpu_custom_call.1} parent=23 // pred_region
          %p134 = scmp.lt.s32.totalorder %s12, 1
          %s135 = scalar_select %p134, %s12, 1
          %s136 = smul.addr %s135, 8
          %s137 = scalar_lea.vmem %s0, %s136
        $region28: #{tpu_custom_call.1} parent=23 // pred_fallthru
          _
      $region24: #{tpu_custom_call.1} parent=5 // pred_fallthru
        _
      %p138 = scmp.le.s32.totalorder 1, %s12
      %p139 = scmp.lt.s32.totalorder %s12, 3
      %p140 = pnand %p138, %p139
      %p141 = pneg %p140
      // Predicated region
      $region29: #{tpu_custom_call.1} parent=5 // pred_check
        _
      $region30: #{tpu_custom_call.1} parent=5 // pred_check_branch
        %143 = sbr.rel (%p140) target = $region32
      $region31: #{tpu_custom_call.1} parent=5 // pred_region
        %s144 = ssub.s32 %s12, 1
        %p145 = scmp.lt.s32.totalorder %s17, 1
        %s146 = scalar_select %p145, %s17, 1
        %s147 = smul.addr %s146, 8
        %s148 = scalar_lea.vmem %s0, %s147
        %p149 = pneg %p38
        %p150 = pneg %p35
        %p151 = pneg %p59
        %p152 = pneg %p56
        %p153 = pneg %p80
        %p154 = pneg %p77
        %p155 = pneg %p106
        %p156 = pneg %p103
        %s157 = sand.u32 %s93, 1
        %s158 = scalar_lea.sflag [#allocation3], %s157
        %s159 = sand.u32 %s93, 1
        %s160 = smul.addr %s159, 8
        %s161 = scalar_lea.vmem [#allocation2], %s160
        %p162 = scmp.lt.s32.totalorder %s17, 1
        %s163 = scalar_select %p162, %s17, 1
        %s164 = smul.addr %s163, 8
        %s165 = scalar_lea.vmem %s0, %s164
        %v167 = vld [vmem:[%s165] sm:$0xff]
        %v168 = vpack.c.bf16 %v167, %v167
        %v169 = vld [vmem:[%s1] sm:$0xff]
        %v170 = vld [vmem:[%s1 + $0x8] sm:$0xff]
        %v171 = vld [vmem:[%s1 + $0x10] sm:$0xff]
        %v172 = vld [vmem:[%s1 + $0x18] sm:$0xff]
        %v173 = vld [vmem:[%s1 + $0x20] sm:$0xff]
        %v174 = vld [vmem:[%s1 + $0x28] sm:$0xff]
        %v175 = vld [vmem:[%s1 + $0x30] sm:$0xff]
        %v176 = vld [vmem:[%s1 + $0x38] sm:$0xff]
        %v177 = vpack.c.bf16 %v171, %v169
        %v178 = vpack.c.bf16 %v172, %v170
        %v179 = vpack.c.bf16 %v175, %v173
        %v180 = vpack.c.bf16 %v176, %v174
        %v181 = vld [vmem:[%s2] sm:$0xff]
        %v182 = vld [vmem:[%s2 + $0x8] sm:$0xff]
        %v183 = vld [vmem:[%s2 + $0x10] sm:$0xff]
        %v184 = vld [vmem:[%s2 + $0x18] sm:$0xff]
        %v185 = vld [vmem:[%s2 + $0x20] sm:$0xff]
        %v186 = vld [vmem:[%s2 + $0x28] sm:$0xff]
        %v187 = vld [vmem:[%s2 + $0x30] sm:$0xff]
        %v188 = vld [vmem:[%s2 + $0x38] sm:$0xff]
        %v189 = vpack.c.bf16 %v182, %v181
        %v190 = vpack.c.bf16 %v184, %v183
        %v191 = vpack.c.bf16 %v186, %v185
        %v192 = vpack.c.bf16 %v188, %v187
        %vm193 = vcmask 261120
        %v195 = vsel %vm193, %v168, 0
        %197 = vmatpush.bf16.msra.mxu0 0
        %198 = vmatpush.bf16.msra.mxu0 0
        %199 = vmatpush.bf16.msra.mxu0 0
        %200 = vmatpush.bf16.msra.mxu0 0
        %201 = vmatpush.bf16.msra.mxu0 0
        %202 = vmatpush.bf16.msra.mxu0 0
        %203 = vmatpush.bf16.msra.mxu0 %v179
        %204 = vmatpush.bf16.msra.mxu0 %v177
        %205 = vmatmul.bf16.gmra.mxu0 %v195
        %v206 = vpop.f32.mrf.mxu0
        %v207 = vadd.f32 0.0, %v206
        %v208 = vpop.f32.mrf.mxu0
        %209 = vdwg.mxu0
        %210 = vmatpush.bf16.msra.mxu0 0
        %211 = vmatpush.bf16.msra.mxu0 0
        %212 = vmatpush.bf16.msra.mxu0 0
        %213 = vmatpush.bf16.msra.mxu0 0
        %214 = vmatpush.bf16.msra.mxu0 0
        %215 = vmatpush.bf16.msra.mxu0 0
        %216 = vmatpush.bf16.msra.mxu0 %v180
        %217 = vmatpush.bf16.msra.mxu0 %v178
        %218 = vmatmul.bf16.gmra.mxu0 %v195
        %v219 = vpop.f32.mrf.mxu0
        %v220 = vadd.f32 0.0, %v219
        %v221 = vpop.f32.mrf.mxu0
        %222 = vdwg.mxu0
        %v223 = vpack.c.bf16 %v207, %v207
        %v224 = vpack.c.bf16 %v220, %v220
        %v226 = vunpack.c.l.b16 %v223
        %v227 = vpack.c.b16 %v226, %v226
        %228 = vrot.lane.b32.xlu0 %v227, 64
        %v229 = vpop.permute.xlu0 %228
        %vm230 = vcmask 130048
        %v232 = vsel %vm230, %v223, 0
        %v235 = vsel %vm230, %v229, 0
        %237 = vmatpush.bf16.xpose.msra.mxu0 0
        %238 = vmatpush.bf16.xpose.msra.mxu0 0
        %239 = vmatpush.bf16.xpose.msra.mxu0 0
        %240 = vmatpush.bf16.xpose.msra.mxu0 0
        %241 = vmatpush.bf16.xpose.msra.mxu0 0
        %242 = vmatpush.bf16.xpose.msra.mxu0 0
        %243 = vmatpush.bf16.xpose.msra.mxu0 0
        %244 = vmatpush.bf16.xpose.msra.mxu0 %v235
        %245 = vmatmul.bf16.gmra.mxu0 %v232
        %v246 = vpop.f32.mrf.mxu0
        %v247 = vadd.f32 0.0, %v246
        %v248 = vpop.f32.mrf.mxu0
        %249 = vdwg.mxu0
        %vm250 = vcmask 64512
        %v251 = vsel %vm250, %v247, -inf
        %252 = vmax.xlane.f32.xlu0 %v251
        %v253 = vpop.xlane.xlu0 %252
        %v254 = vsub.f32 %v247, %v253
        %v255 = vmul.f32 %v254, 1.442695
        %v256 = vpow.pop %v255
        %v257 = vsel %vm250, %v256, 0.0
        %258 = vadd.xlane.f32.xlu0 %v257
        %v259 = vpop.xlane.xlu0 %258
        %v260 = vrcp.pop %v259
        %v261 = vmul.f32 %v259, %v260
        %v262 = vsub.f32 1.0, %v261
        %v263 = vmul.f32 %v260, %v262
        %v264 = vadd.f32 %v260, %v263
        %vm265 = vweird.f32 %v259
        %vm266 = vweird.f32 %v260
        %vm267 = vmor %vm265, %vm266
        %v268 = vsel %vm267, %v260, %v264
        %v269 = vand.u32 2147483647, %v259
        %vm270 = vcmp.eq.f32.partialorder %v269, 8.507059e+37
        %v271 = vand.u32 %v259, 2147483648
        %v272 = vor.u32 1.1754944e-38, %v271
        %v273 = vsel %vm270, %v272, %v268
        %v274 = vmul.f32 %v256, %v273
        %v275 = vpack.c.bf16 %v274, %v274
        %v277 = vsel %vm250, %v275, 0
        %vm279 = vcmask 1043456
        %v281 = vsel %vm279, %v224, 0
        %283 = vmatpush.bf16.msra.mxu0 0
        %284 = vmatpush.bf16.msra.mxu0 0
        %285 = vmatpush.bf16.msra.mxu0 0
        %286 = vmatpush.bf16.msra.mxu0 0
        %287 = vmatpush.bf16.msra.mxu0 0
        %288 = vmatpush.bf16.msra.mxu0 0
        %289 = vmatpush.bf16.msra.mxu0 0
        %290 = vmatpush.bf16.msra.mxu0 %v281
        %291 = vmatmul.bf16.gmra.mxu0 %v277
        %v292 = vpop.f32.mrf.mxu0
        %v293 = vadd.f32 0.0, %v292
        %v294 = vpop.f32.mrf.mxu0
        %295 = vdwg.mxu0
        %296 = vrot.lane.b32.xlu0 %v227, 112
        %v297 = vpop.permute.xlu0 %296
        %298 = vrot.lane.b32.xlu0 %v227, 48
        %v299 = vpop.permute.xlu0 %298
        %v301 = vsel %vm230, %v297, 0
        %v304 = vsel %vm230, %v299, 0
        %306 = vmatpush.bf16.xpose.msra.mxu0 0
        %307 = vmatpush.bf16.xpose.msra.mxu0 0
        %308 = vmatpush.bf16.xpose.msra.mxu0 0
        %309 = vmatpush.bf16.xpose.msra.mxu0 0
        %310 = vmatpush.bf16.xpose.msra.mxu0 0
        %311 = vmatpush.bf16.xpose.msra.mxu0 0
        %312 = vmatpush.bf16.xpose.msra.mxu0 0
        %313 = vmatpush.bf16.xpose.msra.mxu0 %v304
        %314 = vmatmul.bf16.gmra.mxu0 %v301
        %v315 = vpop.f32.mrf.mxu0
        %v316 = vadd.f32 0.0, %v315
        %v317 = vpop.f32.mrf.mxu0
        %318 = vdwg.mxu0
        %v319 = vsel %vm250, %v316, -inf
        %320 = vmax.xlane.f32.xlu0 %v319
        %v321 = vpop.xlane.xlu0 %320
        %v322 = vsub.f32 %v316, %v321
        %v323 = vmul.f32 %v322, 1.442695
        %v324 = vpow.pop %v323
        %v325 = vsel %vm250, %v324, 0.0
        %326 = vadd.xlane.f32.xlu0 %v325
        %v327 = vpop.xlane.xlu0 %326
        %v328 = vrcp.pop %v327
        %v329 = vmul.f32 %v327, %v328
        %v330 = vsub.f32 1.0, %v329
        %v331 = vmul.f32 %v328, %v330
        %v332 = vadd.f32 %v328, %v331
        %vm333 = vweird.f32 %v327
        %vm334 = vweird.f32 %v328
        %vm335 = vmor %vm333, %vm334
        %v336 = vsel %vm335, %v328, %v332
        %v337 = vand.u32 2147483647, %v327
        %vm338 = vcmp.eq.f32.partialorder %v337, 8.507059e+37
        %v339 = vand.u32 %v327, 2147483648
        %v340 = vor.u32 1.1754944e-38, %v339
        %v341 = vsel %vm338, %v340, %v336
        %v342 = vmul.f32 %v324, %v341
        %v343 = vpack.c.bf16 %v342, %v342
        %v345 = vunpack.c.l.b16 %v224
        %v346 = vpack.c.b16 %v345, %v345
        %347 = vrot.lane.b32.xlu0 %v346, 112
        %v348 = vpop.permute.xlu0 %347
        %v350 = vsel %vm250, %v343, 0
        %v353 = vsel %vm279, %v348, 0
        %355 = vmatpush.bf16.msra.mxu0 0
        %356 = vmatpush.bf16.msra.mxu0 0
        %357 = vmatpush.bf16.msra.mxu0 0
        %358 = vmatpush.bf16.msra.mxu0 0
        %359 = vmatpush.bf16.msra.mxu0 0
        %360 = vmatpush.bf16.msra.mxu0 0
        %361 = vmatpush.bf16.msra.mxu0 0
        %362 = vmatpush.bf16.msra.mxu0 %v353
        %363 = vmatmul.bf16.gmra.mxu0 %v350
        %v364 = vpop.f32.mrf.mxu0
        %v365 = vadd.f32 0.0, %v364
        %v366 = vpop.f32.mrf.mxu0
        %367 = vdwg.mxu0
        %368 = vrot.lane.b32.xlu0 %v227, 96
        %v369 = vpop.permute.xlu0 %368
        %370 = vrot.lane.b32.xlu0 %v227, 32
        %v371 = vpop.permute.xlu0 %370
        %v373 = vsel %vm230, %v369, 0
        %v376 = vsel %vm230, %v371, 0
        %378 = vmatpush.bf16.xpose.msra.mxu0 0
        %379 = vmatpush.bf16.xpose.msra.mxu0 0
        %380 = vmatpush.bf16.xpose.msra.mxu0 0
        %381 = vmatpush.bf16.xpose.msra.mxu0 0
        %382 = vmatpush.bf16.xpose.msra.mxu0 0
        %383 = vmatpush.bf16.xpose.msra.mxu0 0
        %384 = vmatpush.bf16.xpose.msra.mxu0 0
        %385 = vmatpush.bf16.xpose.msra.mxu0 %v376
        %386 = vmatmul.bf16.gmra.mxu0 %v373
        %v387 = vpop.f32.mrf.mxu0
        %v388 = vadd.f32 0.0, %v387
        %v389 = vpop.f32.mrf.mxu0
        %390 = vdwg.mxu0
        %v391 = vsel %vm250, %v388, -inf
        %392 = vmax.xlane.f32.xlu0 %v391
        %v393 = vpop.xlane.xlu0 %392
        %v394 = vsub.f32 %v388, %v393
        %v395 = vmul.f32 %v394, 1.442695
        %v396 = vpow.pop %v395
        %v397 = vsel %vm250, %v396, 0.0
        %398 = vadd.xlane.f32.xlu0 %v397
        %v399 = vpop.xlane.xlu0 %398
        %v400 = vrcp.pop %v399
        %v401 = vmul.f32 %v399, %v400
        %v402 = vsub.f32 1.0, %v401
        %v403 = vmul.f32 %v400, %v402
        %v404 = vadd.f32 %v400, %v403
        %vm405 = vweird.f32 %v399
        %vm406 = vweird.f32 %v400
        %vm407 = vmor %vm405, %vm406
        %v408 = vsel %vm407, %v400, %v404
        %v409 = vand.u32 2147483647, %v399
        %vm410 = vcmp.eq.f32.partialorder %v409, 8.507059e+37
        %v411 = vand.u32 %v399, 2147483648
        %v412 = vor.u32 1.1754944e-38, %v411
        %v413 = vsel %vm410, %v412, %v408
        %v414 = vmul.f32 %v396, %v413
        %v415 = vpack.c.bf16 %v414, %v414
        %416 = vrot.lane.b32.xlu0 %v346, 96
        %v417 = vpop.permute.xlu0 %416
        %v419 = vsel %vm250, %v415, 0
        %v422 = vsel %vm279, %v417, 0
        %424 = vmatpush.bf16.msra.mxu0 0
        %425 = vmatpush.bf16.msra.mxu0 0
        %426 = vmatpush.bf16.msra.mxu0 0
        %427 = vmatpush.bf16.msra.mxu0 0
        %428 = vmatpush.bf16.msra.mxu0 0
        %429 = vmatpush.bf16.msra.mxu0 0
        %430 = vmatpush.bf16.msra.mxu0 0
        %431 = vmatpush.bf16.msra.mxu0 %v422
        %432 = vmatmul.bf16.gmra.mxu0 %v419
        %v433 = vpop.f32.mrf.mxu0
        %v434 = vadd.f32 0.0, %v433
        %v435 = vpop.f32.mrf.mxu0
        %436 = vdwg.mxu0
        %437 = vrot.lane.b32.xlu0 %v227, 80
        %v438 = vpop.permute.xlu0 %437
        %439 = vrot.lane.b32.xlu0 %v227, 16
        %v440 = vpop.permute.xlu0 %439
        %v442 = vsel %vm230, %v438, 0
        %v445 = vsel %vm230, %v440, 0
        %447 = vmatpush.bf16.xpose.msra.mxu0 0
        %448 = vmatpush.bf16.xpose.msra.mxu0 0
        %449 = vmatpush.bf16.xpose.msra.mxu0 0
        %450 = vmatpush.bf16.xpose.msra.mxu0 0
        %451 = vmatpush.bf16.xpose.msra.mxu0 0
        %452 = vmatpush.bf16.xpose.msra.mxu0 0
        %453 = vmatpush.bf16.xpose.msra.mxu0 0
        %454 = vmatpush.bf16.xpose.msra.mxu0 %v445
        %455 = vmatmul.bf16.gmra.mxu0 %v442
        %v456 = vpop.f32.mrf.mxu0
        %v457 = vadd.f32 0.0, %v456
        %v458 = vpop.f32.mrf.mxu0
        %459 = vdwg.mxu0
        %v460 = vsel %vm250, %v457, -inf
        %461 = vmax.xlane.f32.xlu0 %v460
        %v462 = vpop.xlane.xlu0 %461
        %v463 = vsub.f32 %v457, %v462
        %v464 = vmul.f32 %v463, 1.442695
        %v465 = vpow.pop %v464
        %v466 = vsel %vm250, %v465, 0.0
        %467 = vadd.xlane.f32.xlu0 %v466
        %v468 = vpop.xlane.xlu0 %467
        %v469 = vrcp.pop %v468
        %v470 = vmul.f32 %v468, %v469
        %v471 = vsub.f32 1.0, %v470
        %v472 = vmul.f32 %v469, %v471
        %v473 = vadd.f32 %v469, %v472
        %vm474 = vweird.f32 %v468
        %vm475 = vweird.f32 %v469
        %vm476 = vmor %vm474, %vm475
        %v477 = vsel %vm476, %v469, %v473
        %v478 = vand.u32 2147483647, %v468
        %vm479 = vcmp.eq.f32.partialorder %v478, 8.507059e+37
        %v480 = vand.u32 %v468, 2147483648
        %v481 = vor.u32 1.1754944e-38, %v480
        %v482 = vsel %vm479, %v481, %v477
        %v483 = vmul.f32 %v465, %v482
        %v484 = vpack.c.bf16 %v483, %v483
        %485 = vrot.lane.b32.xlu0 %v346, 80
        %v486 = vpop.permute.xlu0 %485
        %v488 = vsel %vm250, %v484, 0
        %v491 = vsel %vm279, %v486, 0
        %493 = vmatpush.bf16.msra.mxu0 0
        %494 = vmatpush.bf16.msra.mxu0 0
        %495 = vmatpush.bf16.msra.mxu0 0
        %496 = vmatpush.bf16.msra.mxu0 0
        %497 = vmatpush.bf16.msra.mxu0 0
        %498 = vmatpush.bf16.msra.mxu0 0
        %499 = vmatpush.bf16.msra.mxu0 0
        %500 = vmatpush.bf16.msra.mxu0 %v491
        %501 = vmatmul.bf16.gmra.mxu0 %v488
        %v502 = vpop.f32.mrf.mxu0
        %v503 = vadd.f32 0.0, %v502
        %v504 = vpop.f32.mrf.mxu0
        %505 = vdwg.mxu0
        %507 = vrot.lane.b32.xlu0 %v365, 16
        %v508 = vpop.permute.xlu0 %507
        %511 = vrot.lane.b32.xlu0 %v434, 32
        %v512 = vpop.permute.xlu0 %511
        %515 = vrot.lane.b32.xlu0 %v503, 48
        %v516 = vpop.permute.xlu0 %515
        %v518 = vsel %vm230, %v293, %v508
        %v519 = vsel %vm193, %v518, %v512
        %vm520 = vcmask 392192
        %v521 = vsel %vm520, %v519, %v516
        %v522 = vpack.c.bf16 %v521, %v521
        %vm523 = vcmask 523264
        %v525 = vsel %vm523, %v522, 0
        %527 = vmatpush.bf16.msra.mxu0 0
        %528 = vmatpush.bf16.msra.mxu0 0
        %529 = vmatpush.bf16.msra.mxu0 0
        %530 = vmatpush.bf16.msra.mxu0 0
        %531 = vmatpush.bf16.msra.mxu0 %v192
        %532 = vmatpush.bf16.msra.mxu0 %v191
        %533 = vmatpush.bf16.msra.mxu0 %v190
        %534 = vmatpush.bf16.msra.mxu0 %v189
        %535 = vmatmul.bf16.gmra.mxu0 %v525
        %v536 = vpop.f32.mrf.mxu0
        %v537 = vadd.f32 0.0, %v536
        %v538 = vpop.f32.mrf.mxu0
        %539 = vdwg.mxu0
        %540 = vst.msk [vmem:[%s161] sm:$0xff] %vm193, %v537
        %s541 = sand.u32 %s93, 1
        %s542 = scalar_lea.sflag [#allocation3], %s541
        %s543 = sand.u32 %s93, 1
        %s544 = smul.addr %s543, 8
        %s545 = scalar_lea.vmem [#allocation2], %s544
        // Predicated region
        $region33: #{tpu_custom_call.1} parent=31 // pred_check
          %p546 = pneg %p103
        $region34: #{tpu_custom_call.1} parent=31 // pred_check_branch
          %548 = sbr.rel (%p546) target = $region36
        $region35: #{tpu_custom_call.1} parent=31 // pred_region
          %550 = vsyncadd %s542, 0
          %s551 = smul.addr %s17, 8
          %s552 = scalar_lea.hbm %s3, %s551
          %s554 = sshll.u32 %s545, 4
          %s555 = int_to_ptr.vmem [resolvable:$true] %s554
          %s556 = sshll.u32 %s552, 4
          %s557 = int_to_ptr.hbm [resolvable:$true] %s556
          %559 = dma.vmem_to_hbm [thread:$0]  %s555, 128, %s557, %s542
        $region36: #{tpu_custom_call.1} parent=31 // pred_fallthru
          _
      $region32: #{tpu_custom_call.1} parent=5 // pred_fallthru
        _
      %p560 = scmp.le.s32.totalorder 2, %s12
      // Predicated region
      $region37: #{tpu_custom_call.1} parent=5 // pred_check
        %p561 = pneg %p560
      $region38: #{tpu_custom_call.1} parent=5 // pred_check_branch
        %563 = sbr.rel (%p561) target = $region40
      $region39: #{tpu_custom_call.1} parent=5 // pred_region
        %s564 = ssub.s32 %s12, 2
        // Predicated region
        $region41: #{tpu_custom_call.1} parent=39 // pred_check
          %p565 = pneg %p109
        $region42: #{tpu_custom_call.1} parent=39 // pred_check_branch
          %567 = sbr.rel (%p565) target = $region44
        $region43: #{tpu_custom_call.1} parent=39 // pred_region
          %s568 = sand.u32 %s94, 1
          %s569 = scalar_lea.sflag [#allocation3], %s568
          %s570 = sand.u32 %s94, 1
          %s571 = smul.addr %s570, 8
          %s572 = scalar_lea.vmem [#allocation2], %s571
          %574 = dma.done %s569, 128
        $region44: #{tpu_custom_call.1} parent=39 // pred_fallthru
          _
      $region40: #{tpu_custom_call.1} parent=5 // pred_fallthru
        _
    $region6: #{tpu_custom_call.1} parent=1 // loop_footer
      %s16 = sadd.s32 1, %s12
    $region7: #{tpu_custom_call.1} parent=1 // loop_footer_branch
      %11 = sbr.rel target = $region3
    $region8: #{tpu_custom_call.1} parent=1 // loop_exit
      _
    %575 = vsyncpa [#allocation3], 1
    %s576 = scalar_lea.sflag [#allocation3], 1
    %577 = vsyncpa %s576, 1

</llo_original>
